<compile_context>
chip_gen: v6e
topology: v6e:2x2x1
jax: 0.10.0
libtpu: 0.0.40
codegen_flags: <defaults>
</compile_context>

<pallas_src>
import numpy as np
import jax
import jax.numpy as jnp
from jax.experimental import pallas as pl
from jax.experimental.pallas import tpu as pltpu


def _drop_path_kernel(keep_ref, scale_ref, x_ref, o_ref):
    """One grid step == one (sample, S-tile).

    keep_ref (int32) / scale_ref (f32) live in SMEM via scalar prefetch.
    For dropped samples (keep == 0) the input DMA was redirected to a single
    fixed tile by the index_map, and we just write zeros without reading x.
    """
    b = pl.program_id(0)
    keep = keep_ref[b]

    @pl.when(keep != 0)
    def _():
        s = scale_ref[b].astype(x_ref.dtype)          # multiply in x dtype (VPU)
        o_ref[...] = (x_ref[...] * s).astype(o_ref.dtype)

    @pl.when(keep == 0)
    def _():
        o_ref[...] = jnp.zeros_like(o_ref)


def segformer_drop_path(x, drop_prob, key, training=True, donate_x=False):
    """Matches SegformerDropPath.forward semantics."""
    if drop_prob == 0.0 or not training:
        return x
    if drop_prob >= 1.0:
        # keep_prob == 0 would give 0/0; every sample is dropped -> zeros.
        return jnp.zeros_like(x)

    keep_prob = 1.0 - float(drop_prob)
    B = x.shape[0]

    # Per-sample bernoulli-via-floor, same as torch:
    #   random_tensor = keep_prob + rand; random_tensor.floor_()
    rand = jax.random.uniform(key, (B,), dtype=jnp.float32)
    keep_f = jnp.floor(keep_prob + rand)              # 0.0 / 1.0 per sample
    keep_i32 = keep_f.astype(jnp.int32)               # SMEM gate for DMA skip
    scale = keep_f / keep_prob                        # 0.0 or 1/keep_prob (f32)

    n = int(np.prod(x.shape[1:]))
    itemsize = jnp.dtype(x.dtype).itemsize

    if n % 128 != 0:
        # Ragged case: a fused XLA broadcast-multiply is already 1 read + 1
        # write (same traffic as the kernel), so don't pad + slice (3x traffic).
        bshape = (B,) + (1,) * (x.ndim - 1)
        return x * scale.reshape(bshape).astype(x.dtype)

    S = n // 128
    x3 = x.reshape(B, S, 128)                         # free reshape

    # Tile the per-sample S dimension: ~4 MiB blocks, rounded to the dtype's
    # sublane multiple.  Resident footprint = (in + out) x 2 buffers = 16 MiB,
    # within the 32 MiB scoped-VMEM limit requested below on all generations.
    sublane = max(8, 32 // itemsize)                  # 8 f32, 16 bf16, 32 int8
    target_bytes = 4 << 20
    ts = max(sublane, ((target_bytes // (128 * itemsize)) // sublane) * sublane)
    if ts >= S:
        ts = S                                        # full dim is always legal
        # v7x megacore: keep the grid >= 2 steps so both TensorCores get work.
        if B == 1 and S >= 2 * sublane:
            ts = ((pl.cdiv(S, 2) + sublane - 1) // sublane) * sublane
    num_s_blocks = pl.cdiv(S, ts)                     # partial last block OK

    def x_index_map(b, si, keep_ref, scale_ref):
        # Dropped samples reuse block (b, 0): consecutive steps with an
        # unchanged block index skip the input DMA, removing the dead reads.
        return (b, si * keep_ref[b], 0)

    def o_index_map(b, si, keep_ref, scale_ref):
        return (b, si, 0)

    cost = pl.CostEstimate(flops=B * n, transcendentals=0,
                           bytes_accessed=2 * B * n * itemsize)

    out3 = pl.pallas_call(
        _drop_path_kernel,
        out_shape=jax.ShapeDtypeStruct((B, S, 128), x.dtype),
        grid_spec=pltpu.PrefetchScalarGridSpec(
            num_scalar_prefetch=2,                    # keep_i32, scale -> SMEM
            grid=(B, num_s_blocks),
            in_specs=[pl.BlockSpec((1, ts, 128), x_index_map)],
            out_specs=pl.BlockSpec((1, ts, 128), o_index_map),
        ),
        compiler_params=pltpu.CompilerParams(
            dimension_semantics=("parallel", "parallel"),
            vmem_limit_bytes=32 << 20),
        cost_estimate=cost,
        # x is input index 2 (after the two scalar-prefetch operands).  Only
        # safe when the caller donates x (drop-path output replaces activation).
        input_output_aliases=({2: 0} if donate_x else {}),
    )(keep_i32, scale, x3)

    return out3.reshape(x.shape)


if __name__ == "__main__":
    key = jax.random.PRNGKey(0)
    kx, kr = jax.random.split(key)

    def reference(x, drop_prob, key):
        # Pure-JAX mirror of the PyTorch forward.
        keep_prob = 1.0 - drop_prob
        rand = jax.random.uniform(key, (x.shape[0],), dtype=jnp.float32)
        mask = jnp.floor(keep_prob + rand).reshape((-1,) + (1,) * (x.ndim - 1))
        return (x / keep_prob) * mask.astype(x.dtype)

    # (B, C, H, W) Segformer feature map; C*H*W multiple of 128 -> kernel path.
    x = jax.random.normal(kx, (2, 4, 16, 16), dtype=jnp.float32)

    # inference / drop_prob == 0 -> identity
    assert jnp.array_equal(segformer_drop_path(x, 0.3, kr, training=False), x)
    assert jnp.array_equal(segformer_drop_path(x, 0.0, kr, training=True), x)

    # training path (Pallas kernel)
    y = jax.block_until_ready(segformer_drop_path(x, 0.3, kr, training=True))
    np.testing.assert_allclose(np.asarray(y), np.asarray(reference(x, 0.3, kr)),
                               rtol=1e-5, atol=1e-6)

    # mix of kept / dropped samples exercises the keep==0 (DMA-skip) branch
    x8 = jax.random.normal(kx, (8, 4, 16, 16), dtype=jnp.float32)
    y8 = jax.block_until_ready(segformer_drop_path(x8, 0.5, kr, training=True))
    np.testing.assert_allclose(np.asarray(y8), np.asarray(reference(x8, 0.5, kr)),
                               rtol=1e-5, atol=1e-6)

    # bf16 path (sublane multiple = 16)
    xb = x.astype(jnp.bfloat16)
    yb = jax.block_until_ready(segformer_drop_path(xb, 0.3, kr, training=True))
    np.testing.assert_allclose(np.asarray(yb).astype(np.float32),
                               np.asarray(reference(xb, 0.3, kr)).astype(np.float32),
                               rtol=2e-2, atol=2e-2)

    # ragged feature size (not a multiple of 128) -> fused plain-JAX fallback
    xr = jax.random.normal(kx, (2, 3, 5, 7), dtype=jnp.float32)
    yr = jax.block_until_ready(segformer_drop_path(xr, 0.3, kr, training=True))
    np.testing.assert_allclose(np.asarray(yr), np.asarray(reference(xr, 0.3, kr)),
                               rtol=1e-5, atol=1e-6)

    print("KERNEL_OK")
</pallas_src>

<mosaic_0001>
module attributes {stable_mosaic.version = 11 : i64} {
  func.func @_drop_path_kernel(%arg0: i32, %arg1: i32, %arg2: memref<2xi32, #tpu.memory_space<smem>>, %arg3: memref<2xf32, #tpu.memory_space<smem>>, %arg4: memref<1x8x128xf32, #tpu.memory_space<vmem>>, %arg5: memref<1x8x128xf32, #tpu.memory_space<vmem>>) attributes {dimension_semantics = [#tpu.dimension_semantics<parallel>, #tpu.dimension_semantics<parallel>], iteration_bounds = array<i64: 2, 1>, scalar_prefetch = 2 : i64, scratch_operands = 0 : i64, tpu.core_type = #tpu.core_type<tc>, window_params = [{transform_indices = @transform_0, window_bounds = array<i64: 1, 8, 128>}, {transform_indices = @transform_1, window_bounds = array<i64: 1, 8, 128>}]} {
    %0 = arith.index_cast %arg0 : i32 to index
    %1 = memref.load %arg2[%0] : memref<2xi32, #tpu.memory_space<smem>>
    %c0_i32 = arith.constant 0 : i32
    %2 = arith.cmpi ne, %1, %c0_i32 : i32
    %3 = arith.extui %2 : i1 to i32
    %c0_i32_0 = arith.constant 0 : i32
    %4 = arith.cmpi ne, %3, %c0_i32_0 : i32
    scf.if %4 {
      %8 = arith.index_cast %arg0 : i32 to index
      %9 = memref.load %arg3[%8] : memref<2xf32, #tpu.memory_space<smem>>
      %c0 = arith.constant 0 : index
      %c0_3 = arith.constant 0 : index
      %c0_4 = arith.constant 0 : index
      %10 = vector.load %arg4[%c0, %c0_3, %c0_4] : memref<1x8x128xf32, #tpu.memory_space<vmem>>, vector<1x8x128xf32>
      %11 = vector.broadcast %9 : f32 to vector<1x8x128xf32>
      %12 = arith.mulf %10, %11 : vector<1x8x128xf32>
      %c0_5 = arith.constant 0 : index
      %c0_6 = arith.constant 0 : index
      %c0_7 = arith.constant 0 : index
      %13 = vector.load %arg5[%c0_5, %c0_6, %c0_7] : memref<1x8x128xf32, #tpu.memory_space<vmem>>, vector<1x8x128xf32>
      tpu.vector_store %arg5[%c0_5, %c0_6, %c0_7], %12 {strides = array<i32>} : memref<1x8x128xf32, #tpu.memory_space<vmem>>, vector<1x8x128xf32>,
    } else {
    }
    %c0_i32_1 = arith.constant 0 : i32
    %5 = arith.cmpi eq, %1, %c0_i32_1 : i32
    %6 = arith.extui %5 : i1 to i32
    %c0_i32_2 = arith.constant 0 : i32
    %7 = arith.cmpi ne, %6, %c0_i32_2 : i32
    scf.if %7 {
      %cst = arith.constant 0.000000e+00 : f32
      %8 = vector.broadcast %cst : f32 to vector<1x8x128xf32>
      %c0 = arith.constant 0 : index
      %c0_3 = arith.constant 0 : index
      %c0_4 = arith.constant 0 : index
      %9 = vector.load %arg5[%c0, %c0_3, %c0_4] : memref<1x8x128xf32, #tpu.memory_space<vmem>>, vector<1x8x128xf32>
      tpu.vector_store %arg5[%c0, %c0_3, %c0_4], %8 {strides = array<i32>} : memref<1x8x128xf32, #tpu.memory_space<vmem>>, vector<1x8x128xf32>,
    } else {
    }
    return
  }
  func.func @transform_0(%arg0: i32, %arg1: i32, %arg2: memref<2xi32, #tpu.memory_space<smem>>, %arg3: memref<2xf32, #tpu.memory_space<smem>>) -> (i32, i32, i32) {
    %0 = arith.index_cast %arg0 : i32 to index
    %1 = memref.load %arg2[%0] : memref<2xi32, #tpu.memory_space<smem>>
    %2 = arith.muli %arg1, %1 : i32
    %c0_i32 = arith.constant 0 : i32
    %c0_i32_0 = arith.constant 0 : i32
    return %arg0, %2, %c0_i32 : i32, i32, i32
  }
  func.func @transform_1(%arg0: i32, %arg1: i32, %arg2: memref<2xi32, #tpu.memory_space<smem>>, %arg3: memref<2xf32, #tpu.memory_space<smem>>) -> (i32, i32, i32) {
    %c0_i32 = arith.constant 0 : i32
    %c0_i32_0 = arith.constant 0 : i32
    return %arg0, %arg1, %c0_i32 : i32, i32, i32
  }
}

</mosaic_0001>

<llo_original>
// kernel: tpu_custom_call.1
$region0: #{tpu_custom_call.1}
  #allocation0 [shape = 'u32[]', space=smem, size = 0x4, offset = 0x4, fixed_abs, tag = 'smem constant byte address 0x4 - core index']
  #allocation1 [shape = 'u32[144,128]{1,0:T(1,128)}', space=vmem, size = 0x12000, scoped, tag = 'internal scratch']
  #allocation2 [shape = 's32[1]{0}', space=sflag, size = 0x4, scoped, tag = 'scoped memory for tpu_custom_call.1']
  #allocation3 [shape = 'u8[512]{0}', space=smem, size = 0x200, scoped, tag = 'prefetched SMEM operand 0']
  #allocation4 [shape = 'u8[512]{0}', space=smem, size = 0x200, scoped, tag = 'prefetched SMEM operand 1']
  %s0 = inlined_call_operand.hbm [shape: s32[2], index: 0, kind: input, shape index: {}]
  %s1 = inlined_call_operand.vmem [shape: f32[2], index: 1, kind: input, shape index: {}]
  %s2 = inlined_call_operand.hbm [shape: f32[2,8,128], index: 2, kind: input, shape index: {}]
  %s3 = inlined_call_operand.hbm [shape: f32[2,8,128], index: 3, kind: output, shape index: {}]
  %s4 = sld [smem:[#allocation0]]
  $region49: #{tpu_custom_call.1} parent=0
    _
  %s6 = ssub.s32 1, %s4
  %s7 = scalar_select 0, %s6, %s4
  %9 = dma.hbm_to_smem %s0, 16, [#allocation3], [#allocation2]
  %s10 = sshll.u32 %s1, 4
  %s11 = int_to_ptr.vmem [resolvable:$true] %s10
  %13 = dma.vmem_to_smem %s11, 16, [#allocation4], [#allocation2]
  %14 = dma.done [#allocation2], 32
  %15 = sfence
  $region1: #{tpu_custom_call.1} parent=0
    #allocation5 [shape = 'u8[8192]{0}', space=vmem, size = 0x2000, scoped, tag = 'input window, operand 2']
    #allocation6 [shape = 's32[2]{0}', space=sflag, size = 0x8, scoped, tag = 'scoped memory for tpu_custom_call.1']
    #allocation7 [shape = 's32[2]{0}', space=sflag, size = 0x8, scoped, tag = 'scoped memory for tpu_custom_call.1']
    #allocation8 [shape = 'u8[8192]{0}', space=vmem, size = 0x2000, scoped, tag = 'output window, operand 0']
    %16 = vsyncpa [#allocation6], 0
    %s17 = scalar_lea.sflag [#allocation6], 1
    %18 = vsyncpa %s17, 0
    %19 = vsyncpa [#allocation7], 0
    %s20 = scalar_lea.sflag [#allocation7], 1
    %21 = vsyncpa %s20, 0
    loop: start=0, step=1, limit=4
    $region2: #{tpu_custom_call.1} parent=1 // loop_pre_header
      _
    $region3: #{tpu_custom_call.1} parent=1 // loop_header
      %s23 = sphi 0, %s27
      %p24 = scmp.ge.s32.totalorder %s23, 4
      %s30 = sphi 0, %s42
      %s31 = sphi 0, %s38
      %s32 = sphi 0, %s30
      %s33 = sphi 0, %s31
      %s34 = sphi 0, %s32
      %s35 = sphi 0, %s33
      %s51 = sphi 0, %s53
      %s54 = sphi 0, %s51
      %s55 = sphi 0, %s54
      %s71 = sphi 0, %s55
      %s79 = sphi 0, %s81
      %s82 = sphi 0, %s79
      %s83 = sphi 0, %s82
      %s99 = sphi 0, %s83
    $region4: #{tpu_custom_call.1} parent=1 // loop_header_branch
      %26 = sbr.rel (%p24) target = $region8
    $region5: #{tpu_custom_call.1} parent=1 // loop_body
      %s28 = ssub.s32 %s23, 1
      %s29 = ssub.s32 %s23, 2
      %s36 = sadd.s32 1, %s31
      %p37 = scmp.ge.s32.totalorder %s36, 1
      %s38 = scalar_select %p37, 0, %s36
      %s39 = sadd.s32 1, %s30
      %s40 = scalar_select %p37, %s39, %s30
      %p41 = scmp.ge.s32.totalorder %s40, 2
      %s42 = scalar_select %p41, 0, %s40
      %s43 = sld [smem:[#allocation3 + %s30]]
      %s44 = smul.u32 %s31, %s43
      %s45 = sld [smem:[#allocation3 + %s42]]
      %s46 = smul.u32 %s38, %s45
      %s47 = ssub.s32 %s30, %s42
      %s48 = ssub.s32 %s44, %s46
      %s49 = sor.u32 %s47, %s48
      %p50 = scmp.eq.s32.totalorder %s49, 0
      %s52 = sadd.s32 %s51, 1
      %s53 = scalar_select %p50, %s51, %s52
      %p56 = pneg %p50
      %p57 = scmp.eq.s32.totalorder %s23, 1
      %p58 = por %p56, %p57
      %p59 = scmp.ne.s32.totalorder %s51, %s54
      %p60 = scmp.eq.s32.totalorder %s23, 0
      %p61 = por %p59, %p60
      %p62 = scmp.ne.s32.totalorder %s51, %s54
      %p63 = scmp.eq.s32.totalorder %s28, 1
      %p64 = por %p62, %p63
      %p65 = scmp.ne.s32.totalorder %s54, %s55
      %p66 = scmp.eq.s32.totalorder %s28, 0
      %p67 = por %p65, %p66
      %p68 = scmp.ne.s32.totalorder %s54, %s55
      %p69 = scmp.eq.s32.totalorder %s29, 1
      %p70 = por %p68, %p69
      %p72 = scmp.ne.s32.totalorder %s55, %s71
      %p73 = scmp.eq.s32.totalorder %s29, 0
      %p74 = por %p72, %p73
      %s75 = ssub.s32 %s30, %s42
      %s76 = ssub.s32 %s31, %s38
      %s77 = sor.u32 %s75, %s76
      %p78 = scmp.eq.s32.totalorder %s77, 0
      %s80 = sadd.s32 %s79, 1
      %s81 = scalar_select %p78, %s79, %s80
      %p84 = pneg %p78
      %p85 = scmp.eq.s32.totalorder %s23, 1
      %p86 = por %p84, %p85
      %p87 = scmp.ne.s32.totalorder %s79, %s82
      %p88 = scmp.eq.s32.totalorder %s23, 0
      %p89 = por %p87, %p88
      %p90 = scmp.ne.s32.totalorder %s79, %s82
      %p91 = scmp.eq.s32.totalorder %s28, 1
      %p92 = por %p90, %p91
      %p93 = scmp.ne.s32.totalorder %s82, %s83
      %p94 = scmp.eq.s32.totalorder %s28, 0
      %p95 = por %p93, %p94
      %p96 = scmp.ne.s32.totalorder %s82, %s83
      %p97 = scmp.eq.s32.totalorder %s29, 1
      %p98 = por %p96, %p97
      %p100 = scmp.ne.s32.totalorder %s83, %s99
      %p101 = scmp.eq.s32.totalorder %s29, 0
      %p102 = por %p100, %p101
      %p103 = scmp.le.s32.totalorder 1, %s23
      %p104 = scmp.lt.s32.totalorder %s23, 3
      %p105 = pnand %p103, %p104
      %p106 = pneg %p105
      // Predicated region
      $region9: #{tpu_custom_call.1} parent=5 // pred_check
        _
      $region10: #{tpu_custom_call.1} parent=5 // pred_check_branch
        %108 = sbr.rel (%p105) target = $region12
      $region11: #{tpu_custom_call.1} parent=5 // pred_region
        %s109 = ssub.s32 %s23, 1
      $region12: #{tpu_custom_call.1} parent=5 // pred_fallthru
        _
      %p110 = scmp.lt.s32.totalorder %s23, 2
      // Predicated region
      $region13: #{tpu_custom_call.1} parent=5 // pred_check
        %p111 = pneg %p110
      $region14: #{tpu_custom_call.1} parent=5 // pred_check_branch
        %113 = sbr.rel (%p111) target = $region16
      $region15: #{tpu_custom_call.1} parent=5 // pred_region
        // Predicated region
        $region17: #{tpu_custom_call.1} parent=15 // pred_check
          %p114 = pneg %p61
        $region18: #{tpu_custom_call.1} parent=15 // pred_check_branch
          %116 = sbr.rel (%p114) target = $region20
        $region19: #{tpu_custom_call.1} parent=15 // pred_region
          %s117 = sand.u32 %s51, 1
          %s118 = scalar_lea.sflag [#allocation6], %s117
          %s119 = sand.u32 %s51, 1
          %s120 = smul.addr %s119, 8
          %s121 = scalar_lea.vmem [#allocation5], %s120
          %s122 = sld [smem:[#allocation3 + %s30]]
          %s123 = smul.u32 %s31, %s122
          %s125 = ssub.s32 128, 128
          %126 = vsyncadd %s118, %s125
          %s127 = sadd.s32 %s123, %s30
          %s128 = smul.addr %s127, 128
          %s129 = scalar_lea.hbm %s2, %s128
          %s131 = sshll.u32 %s121, 4
          %s132 = int_to_ptr.vmem [resolvable:$true] %s131
          %134 = dma.hbm_to_vmem [thread:$0]  %s129, 128, %s132, %s118
        $region20: #{tpu_custom_call.1} parent=15 // pred_fallthru
          _
      $region16: #{tpu_custom_call.1} parent=5 // pred_fallthru
        _
      %p135 = scmp.le.s32.totalorder 1, %s23
      %p136 = scmp.lt.s32.totalorder %s23, 3
      %p137 = pnand %p135, %p136
      %p138 = pneg %p137
      // Predicated region
      $region21: #{tpu_custom_call.1} parent=5 // pred_check
        _
      $region22: #{tpu_custom_call.1} parent=5 // pred_check_branch
        %140 = sbr.rel (%p137) target = $region24
      $region23: #{tpu_custom_call.1} parent=5 // pred_region
        %s141 = ssub.s32 %s23, 1
        %s142 = sand.u32 %s54, 1
        %s143 = scalar_lea.sflag [#allocation6], %s142
        %s144 = sand.u32 %s54, 1
        %s145 = smul.addr %s144, 8
        %s146 = scalar_lea.vmem [#allocation5], %s145
        // Predicated region
        $region25: #{tpu_custom_call.1} parent=23 // pred_check
          %p147 = pneg %p67
        $region26: #{tpu_custom_call.1} parent=23 // pred_check_branch
          %149 = sbr.rel (%p147) target = $region28
        $region27: #{tpu_custom_call.1} parent=23 // pred_region
          %150 = dma.done %s143, 128
        $region28: #{tpu_custom_call.1} parent=23 // pred_fallthru
          _
        %s151 = sand.u32 %s54, 1
        %s152 = scalar_lea.sflag [#allocation6], %s151
        %s153 = sand.u32 %s54, 1
        %s154 = smul.addr %s153, 8
        %s155 = scalar_lea.vmem [#allocation5], %s154
        %p156 = pneg %p67
        %p157 = pneg %p64
        %p158 = pneg %p95
        %p159 = pneg %p92
        %s160 = sand.u32 %s82, 1
        %s161 = scalar_lea.sflag [#allocation7], %s160
        %s162 = sand.u32 %s82, 1
        %s163 = smul.addr %s162, 8
        %s164 = scalar_lea.vmem [#allocation8], %s163
        %s165 = sld [smem:[#allocation3 + %s32]]
        %s166 = smul.u32 %s33, %s165
        %s167 = sld [smem:[#allocation3 + %s32]]
        %p168 = scmp.ne.s32.totalorder %s167, 0
        // Predicated region
        $region29: #{tpu_custom_call.1} parent=23 // pred_check
          %p169 = pneg %p168
        $region30: #{tpu_custom_call.1} parent=23 // pred_check_branch
          %171 = sbr.rel (%p169) target = $region32
        $region31: #{tpu_custom_call.1} parent=23 // pred_region
          %s172 = sld [smem:[#allocation4 + %s32]]
          %v173 = vld [vmem:[%s146] sm:$0xff]
          %v174 = vstv %s172
          %v175 = vmul.f32 %v173, %v174
          %176 = vst [vmem:[%s164] sm:$0xff] %v175
        $region32: #{tpu_custom_call.1} parent=23 // pred_fallthru
          _
        %p177 = scmp.eq.s32.totalorder %s167, 0
        // Predicated region
        $region33: #{tpu_custom_call.1} parent=23 // pred_check
          %p178 = pneg %p177
        $region34: #{tpu_custom_call.1} parent=23 // pred_check_branch
          %180 = sbr.rel (%p178) target = $region36
        $region35: #{tpu_custom_call.1} parent=23 // pred_region
          %181 = vst [vmem:[%s164] sm:$0xff] 0.0
        $region36: #{tpu_custom_call.1} parent=23 // pred_fallthru
          _
        %s182 = sand.u32 %s82, 1
        %s183 = scalar_lea.sflag [#allocation7], %s182
        %s184 = sand.u32 %s82, 1
        %s185 = smul.addr %s184, 8
        %s186 = scalar_lea.vmem [#allocation8], %s185
        // Predicated region
        $region37: #{tpu_custom_call.1} parent=23 // pred_check
          %p187 = pneg %p92
        $region38: #{tpu_custom_call.1} parent=23 // pred_check_branch
          %189 = sbr.rel (%p187) target = $region40
        $region39: #{tpu_custom_call.1} parent=23 // pred_region
          %s191 = ssub.s32 128, 128
          %192 = vsyncadd %s183, %s191
          %s193 = sadd.s32 %s33, %s32
          %s194 = smul.addr %s193, 128
          %s195 = scalar_lea.hbm %s3, %s194
          %s197 = sshll.u32 %s186, 4
          %s198 = int_to_ptr.vmem [resolvable:$true] %s197
          %200 = dma.vmem_to_hbm [thread:$0]  %s198, 128, %s195, %s183
        $region40: #{tpu_custom_call.1} parent=23 // pred_fallthru
          _
      $region24: #{tpu_custom_call.1} parent=5 // pred_fallthru
        _
      %p201 = scmp.le.s32.totalorder 2, %s23
      // Predicated region
      $region41: #{tpu_custom_call.1} parent=5 // pred_check
        %p202 = pneg %p201
      $region42: #{tpu_custom_call.1} parent=5 // pred_check_branch
        %204 = sbr.rel (%p202) target = $region44
      $region43: #{tpu_custom_call.1} parent=5 // pred_region
        %s205 = ssub.s32 %s23, 2
        // Predicated region
        $region45: #{tpu_custom_call.1} parent=43 // pred_check
          %p206 = pneg %p98
        $region46: #{tpu_custom_call.1} parent=43 // pred_check_branch
          %208 = sbr.rel (%p206) target = $region48
        $region47: #{tpu_custom_call.1} parent=43 // pred_region
          %s209 = sand.u32 %s83, 1
          %s210 = scalar_lea.sflag [#allocation7], %s209
          %s211 = sand.u32 %s83, 1
          %s212 = smul.addr %s211, 8
          %s213 = scalar_lea.vmem [#allocation8], %s212
          %214 = dma.done %s210, 128
        $region48: #{tpu_custom_call.1} parent=43 // pred_fallthru
          _
      $region44: #{tpu_custom_call.1} parent=5 // pred_fallthru
        _
    $region6: #{tpu_custom_call.1} parent=1 // loop_footer
      %s27 = sadd.s32 1, %s23
    $region7: #{tpu_custom_call.1} parent=1 // loop_footer_branch
      %22 = sbr.rel target = $region3
    $region8: #{tpu_custom_call.1} parent=1 // loop_exit
      _
    %215 = vsyncpa [#allocation6], 1
    %s216 = scalar_lea.sflag [#allocation6], 1
    %217 = vsyncpa %s216, 1
    %218 = vsyncpa [#allocation7], 1
    %s219 = scalar_lea.sflag [#allocation7], 1
    %220 = vsyncpa %s219, 1

</llo_original>
